<compile_context>
chip_gen: v6e
topology: v6e:2x2x1
jax: 0.10.0
libtpu: 0.0.40
codegen_flags: <defaults>
</compile_context>

<pallas_src>
import random

import jax
import jax.numpy as jnp
from jax.experimental import pallas as pl
from jax.experimental.pallas import tpu as pltpu


def _hbm_copy_kernel(x_hbm_ref, o_hbm_ref, sem):
    # Whole-array HBM -> HBM DMA; no VMEM staging, no per-tile pipeline.
    cp = pltpu.make_async_copy(x_hbm_ref, o_hbm_ref, sem)
    cp.start()
    cp.wait()


def waveform_copy(x):
    """Materialized device copy of a waveform of any shape/dtype.

    Implemented as one direct HBM->HBM DMA (runs at the DMA-engine/HBM rate on
    v5e/v6e/v7x).  No (8, 128) tiling constraints, so arbitrary audio lengths
    (e.g. 16000 samples) work without padding or remainder handling.
    """
    return pl.pallas_call(
        _hbm_copy_kernel,
        out_shape=jax.ShapeDtypeStruct(x.shape, x.dtype),
        in_specs=[pl.BlockSpec(memory_space=pl.ANY)],
        out_specs=pl.BlockSpec(memory_space=pl.ANY),
        scratch_shapes=[pltpu.SemaphoreType.DMA],
    )(x)


class RandomPitchShiftLayer:
    """JAX/Pallas port of the PyTorch RandomPitchShiftLayer.

    The stochastic gate is evaluated with Python's `random` module at call
    time (exactly like the reference module), so it is a Python-level branch,
    not a traced one.
    """

    def __init__(self, p: float = 0.05, sample_rate: int = 16000,
                 min_steps: int = -5, max_steps: int = 5, seed: int = 0):
        self.p = p
        self.sample_rate = sample_rate
        self.min_steps = min_steps
        self.max_steps = max_steps
        self._rng = random.Random(seed)  # deterministic, in-script

    def __call__(self, waveform):
        if self._rng.random() < self.p:
            n_steps = self._rng.uniform(self.min_steps, self.max_steps)
            del n_steps
            # TODO(synk): torchaudio.transforms.PitchShift (complex STFT phase
            # vocoder + fractional polyphase resample) has no clean Pallas
            # equivalent; this rare branch currently returns a materialized
            # copy of the waveform instead of pitch-shifting it.
            return waveform_copy(waveform)
        # Hot (1 - p) path: PyTorch hands back the same tensor, so we return
        # the input array unchanged -- no kernel launch, no HBM traffic.
        return waveform


if __name__ == "__main__":
    key = jax.random.PRNGKey(0)
    # 1-second clips at 16 kHz: (batch=2, samples=16000).  Note 16000 is NOT a
    # multiple of 512 -- the DMA copy kernel handles this with no padding.
    waveform = jax.random.normal(key, (2, 16000), dtype=jnp.float32)

    # Exercise the Pallas HBM->HBM copy kernel once and verify it bit-exactly.
    copied = jax.block_until_ready(waveform_copy(waveform))
    assert copied.shape == waveform.shape and copied.dtype == waveform.dtype
    assert bool(jnp.array_equal(copied, waveform))

    # Run the layer itself.  With p=0.05 and seed=0 the gate does not fire, so
    # this is the hot path: the input is returned unchanged (no kernel).
    layer = RandomPitchShiftLayer(p=0.05, sample_rate=16000,
                                  min_steps=-5, max_steps=5, seed=0)
    out = jax.block_until_ready(layer(waveform))
    assert out.shape == waveform.shape and out.dtype == waveform.dtype
    assert bool(jnp.array_equal(out, waveform))

    print("KERNEL_OK")
</pallas_src>

<mosaic_0001>
module attributes {stable_mosaic.version = 11 : i64} {
  func.func @_hbm_copy_kernel(%arg0: memref<2x16000xf32, #tpu.memory_space<any>>, %arg1: memref<2x16000xf32, #tpu.memory_space<any>>, %arg2: memref<!tpu.dma_semaphore, #tpu.memory_space<semaphore_mem>>) attributes {dimension_semantics = [], scalar_prefetch = 0 : i64, scratch_operands = 1 : i64, tpu.core_type = #tpu.core_type<tc>} {
    tpu.enqueue_dma source(%arg0 : memref<2x16000xf32, #tpu.memory_space<any>>) target(%arg1 : memref<2x16000xf32, #tpu.memory_space<any>>) target_semaphore(%arg2 : memref<!tpu.dma_semaphore, #tpu.memory_space<semaphore_mem>>)
    tpu.wait_dma2 semaphore(%arg2 : memref<!tpu.dma_semaphore, #tpu.memory_space<semaphore_mem>>) src(%arg0 : memref<2x16000xf32, #tpu.memory_space<any>>) dst(%arg1 : memref<2x16000xf32, #tpu.memory_space<any>>)
    return
  }
}

</mosaic_0001>

<llo_original>
// kernel: tpu_custom_call.1
$region0: #{tpu_custom_call.1}
  #allocation0 [shape = 'u32[]', space=smem, size = 0x4, offset = 0x4, fixed_abs, tag = 'smem constant byte address 0x4 - core index']
  #allocation1 [shape = 'u32[144,128]{1,0:T(1,128)}', space=vmem, size = 0x12000, scoped, tag = 'internal scratch']
  #allocation2 [shape = 's32[1]{0}', space=sflag, size = 0x4, scoped, tag = 'scratch operand']
  #allocation3 [shape = 's32[]', space=sflag, size = 0x4, offset = 0, fixed_abs, tag = 'sflag constant byte address 0x0 - dummy sync flag']
  #allocation4 [shape = 'u32[0]{0}', space=smem, size = 0, offset = 0, fixed_abs, tag = 'smem constant byte address 0x0 - null']
  %s0 = inlined_call_operand.hbm [shape: f32[2,16000], index: 0, kind: input, shape index: {}]
  %s1 = inlined_call_operand.hbm [shape: f32[2,16000], index: 1, kind: output, shape index: {}]
  %s2 = sld [smem:[#allocation0]]
  $region2: #{tpu_custom_call.1} parent=0
    _
  %s4 = ssub.s32 1, %s2
  %s5 = scalar_select 0, %s4, %s2
  %s7 = sshll.u32 1, 14
  %s8 = sxor.u32 4294967295, %s7
  %12 = dma.general %s0, 4000, %s1, [#allocation2], 131072, [#allocation4], 0, 0
  %s13 = smul.u32 2, 1
  %s14 = smul.u32 %s13, 125
  %s15 = sshll.u32 %s14, 4
  %16 = dma.done [#allocation2], %s15
  %17 = vsyncmov [#allocation2]
  %s18 = vpop.sfrf %17
  %p19 = scmp.eq.s32.totalorder %s18, 0
  %p20 = pneg %p19
  %22 = shalt.err (%p20)

</llo_original>
